<compile_context>
chip_gen: v7x
topology: tpu7x:2x2x1
jax: 0.10.0
libtpu: 0.0.40
codegen_flags: <defaults>
</compile_context>

<pallas_src>
import functools

import jax
import jax.numpy as jnp
from jax import lax
from jax.experimental import pallas as pl
from jax.experimental.pallas import tpu as pltpu

BN_EPS = 1e-5
_VMEM_LIMIT = 32 * 1024 * 1024  # safe on v5e/v6e (128 MiB) and v7x (64 MiB physical)


def _round_up(x, m):
    return (x + m - 1) // m * m


# ---------------------------------------------------------------------------
# Pass 1: tiled conv matmul + streaming per-channel sum / sum-of-squares.
# ---------------------------------------------------------------------------
def _conv_stats_kernel(xcol_ref, w_ref, y_ref, csum_ref, csumsq_ref):
    """xcol: (TM, Kp) f32   -- one M-tile of the im2col matrix (zero-padded rows/cols)
       w:    (Kp, 2*Cp) f32 -- fused [value | gate] weights, zero-padded
       y:    (TM, 2*Cp) f32 -- pre-BN conv output tile
       csum / csumsq: (1, 2*Cp) f32 -- resident accumulators across the M grid axis
    """
    i = pl.program_id(0)

    @pl.when(i == 0)
    def _():
        csum_ref[...] = jnp.zeros_like(csum_ref)
        csumsq_ref[...] = jnp.zeros_like(csumsq_ref)

    # Single fused MXU matmul for both GLU halves (conv bias omitted: it is
    # exactly cancelled by training-mode BN mean subtraction).
    y = jnp.dot(xcol_ref[...], w_ref[...], preferred_element_type=jnp.float32)
    y_ref[...] = y

    # Streaming stats: one pass over the tile; zero-padded rows contribute 0.
    csum_ref[...] += jnp.sum(y, axis=0, keepdims=True)
    csumsq_ref[...] += jnp.sum(y * y, axis=0, keepdims=True)


# ---------------------------------------------------------------------------
# Pass 2: folded BN affine + GLU, fully parallel over M tiles.
# ---------------------------------------------------------------------------
def _bn_glu_kernel(y_ref, scale_ref, shift_ref, o_ref, *, c_pad):
    """y: (TM, 2*Cp), scale/shift: (1, 2*Cp), out: (TM, Cp)."""
    z = y_ref[...] * scale_ref[...] + shift_ref[...]   # single FMA per element
    a = z[:, :c_pad]          # value half
    g = z[:, c_pad:]          # gate half
    o_ref[...] = (a * jax.nn.sigmoid(g)).astype(o_ref.dtype)


# ---------------------------------------------------------------------------
# Host-side helpers / wrapper.
# ---------------------------------------------------------------------------
def _im2col_1d(x, kernel_size, stride, padding, dilation):
    """x: (N, Cin, L) -> (N*Lout, Cin*kernel_size), Lout."""
    n, cin, length = x.shape
    xp = jnp.pad(x, ((0, 0), (0, 0), (padding, padding)))
    lp = length + 2 * padding
    lout = (lp - dilation * (kernel_size - 1) - 1) // stride + 1
    idx = (jnp.arange(lout)[:, None] * stride
           + jnp.arange(kernel_size)[None, :] * dilation)
    patches = xp[:, :, idx]                          # (N, Cin, Lout, k)
    patches = jnp.transpose(patches, (0, 2, 1, 3))   # (N, Lout, Cin, k)
    return patches.reshape(n * lout, cin * kernel_size), lout


def gated_conv_bn_1d(x, conv_w, conv_b, bn_gamma, bn_beta,
                     *, stride=1, padding=0, dilation=1,
                     block_m=256, use_bf16_matmul=False):
    """Forward pass of GatedConvBN1d (training-mode BatchNorm).

    x:        (N, Cin, L)          float32   (PyTorch NCL layout)
    conv_w:   (2*Cout, Cin, k)     float32
    conv_b:   (2*Cout,)            float32   (accepted for API parity; its effect is
                                              exactly cancelled by training-mode BN)
    bn_gamma: (2*Cout,)            float32
    bn_beta:  (2*Cout,)            float32
    returns:  (N, Cout, Lout)      float32
    """
    del conv_b  # cancelled by BN mean subtraction -> dead work in the kernel

    n, cin, _ = x.shape
    two_cout, _, k = conv_w.shape
    cout = two_cout // 2

    xcol, lout = _im2col_1d(x, k, stride, padding, dilation)        # (M, K)
    m, kk = xcol.shape

    # --- MXU/lane-friendly padding ------------------------------------------
    c_pad = _round_up(cout, 128)            # lane-dense output / clean half split
    k_pad = _round_up(kk, 128)              # aligned contraction dim
    tm = min(block_m, _round_up(m, 8))      # M tile (sublane multiple)
    m_pad = _round_up(m, tm)
    num_tiles = m_pad // tm

    xcol_p = jnp.pad(xcol, ((0, m_pad - m), (0, k_pad - kk)))       # (Mp, Kp)

    # Weights: (2Cout, Cin*k) -> (K, 2Cout) -> pad each half -> (Kp, 2*Cp)
    w_mat = conv_w.reshape(two_cout, kk).T
    w_val = jnp.pad(w_mat[:, :cout], ((0, k_pad - kk), (0, c_pad - cout)))
    w_gate = jnp.pad(w_mat[:, cout:], ((0, k_pad - kk), (0, c_pad - cout)))
    w_p = jnp.concatenate([w_val, w_gate], axis=1)                  # (Kp, 2*Cp)

    def _pad_halves(v):
        return jnp.concatenate([jnp.pad(v[:cout], (0, c_pad - cout)),
                                jnp.pad(v[cout:], (0, c_pad - cout))], axis=0)

    gamma_p = _pad_halves(bn_gamma)
    beta_p = _pad_halves(bn_beta)

    if use_bf16_matmul:
        # Optional: halve X/W HBM + VMEM traffic and use the bf16 MXU path.
        # Off by default to keep strict f32 parity with the reference.
        xcol_p = xcol_p.astype(jnp.bfloat16)
        w_p = w_p.astype(jnp.bfloat16)

    # --- Pass 1: conv matmul + streaming stats ------------------------------
    y_flat, csum, csumsq = pl.pallas_call(
        _conv_stats_kernel,
        out_shape=(
            jax.ShapeDtypeStruct((m_pad, 2 * c_pad), jnp.float32),
            jax.ShapeDtypeStruct((1, 2 * c_pad), jnp.float32),
            jax.ShapeDtypeStruct((1, 2 * c_pad), jnp.float32),
        ),
        grid_spec=pltpu.PrefetchScalarGridSpec(
            num_scalar_prefetch=0,
            grid=(num_tiles,),
            in_specs=[
                pl.BlockSpec((tm, k_pad), lambda i: (i, 0)),
                pl.BlockSpec((k_pad, 2 * c_pad), lambda i: (0, 0)),
            ],
            out_specs=(
                pl.BlockSpec((tm, 2 * c_pad), lambda i: (i, 0)),
                pl.BlockSpec((1, 2 * c_pad), lambda i: (0, 0)),
                pl.BlockSpec((1, 2 * c_pad), lambda i: (0, 0)),
            ),
        ),
        compiler_params=pltpu.CompilerParams(
            dimension_semantics=("arbitrary",),      # resident stats accumulator
            vmem_limit_bytes=_VMEM_LIMIT),
    )(xcol_p, w_p)

    # --- Fold BN into a per-channel affine (tiny (1, 2C) work) --------------
    # Note: var = E[y^2] - mean^2 in f32; acceptable here since |mean| is not
    # far larger than std for conv activations. Zero-padded rows contributed 0
    # to both accumulators, so we divide by the true row count m.
    inv_m = 1.0 / float(m)
    mean = csum * inv_m
    var = jnp.maximum(csumsq * inv_m - mean * mean, 0.0)   # biased variance
    scale = gamma_p[None, :] * lax.rsqrt(var + BN_EPS)     # (1, 2*Cp)
    shift = beta_p[None, :] - mean * scale                 # (1, 2*Cp)

    # --- Pass 2: normalize + GLU (parallel over M tiles) --------------------
    out_flat = pl.pallas_call(
        functools.partial(_bn_glu_kernel, c_pad=c_pad),
        out_shape=jax.ShapeDtypeStruct((m_pad, c_pad), jnp.float32),
        grid_spec=pltpu.PrefetchScalarGridSpec(
            num_scalar_prefetch=0,
            grid=(num_tiles,),
            in_specs=[
                pl.BlockSpec((tm, 2 * c_pad), lambda i: (i, 0)),
                pl.BlockSpec((1, 2 * c_pad), lambda i: (0, 0)),
                pl.BlockSpec((1, 2 * c_pad), lambda i: (0, 0)),
            ],
            out_specs=pl.BlockSpec((tm, c_pad), lambda i: (i, 0)),
        ),
        compiler_params=pltpu.CompilerParams(
            dimension_semantics=("parallel",),
            vmem_limit_bytes=_VMEM_LIMIT),
    )(y_flat, scale, shift)

    # (Mp, Cp) -> valid (M, Cout) -> (N, Lout, Cout) -> (N, Cout, Lout)
    out = out_flat[:m, :cout].reshape(n, lout, cout)
    return jnp.transpose(out, (0, 2, 1))


def _reference(x, conv_w, conv_b, bn_gamma, bn_beta, *, stride, padding, dilation):
    """Pure-JAX reference mirroring the PyTorch forward (training-mode BN)."""
    y = lax.conv_general_dilated(
        x, conv_w, window_strides=(stride,), padding=[(padding, padding)],
        rhs_dilation=(dilation,), dimension_numbers=("NCH", "OIH", "NCH"))
    y = y + conv_b[None, :, None]
    mean = jnp.mean(y, axis=(0, 2), keepdims=True)
    var = jnp.mean(jnp.square(y - mean), axis=(0, 2), keepdims=True)
    y = (y - mean) * lax.rsqrt(var + BN_EPS)
    y = y * bn_gamma[None, :, None] + bn_beta[None, :, None]
    c = y.shape[1] // 2
    return y[:, :c, :] * jax.nn.sigmoid(y[:, c:, :])


if __name__ == "__main__":
    # Small, deterministic configuration.
    N, CIN, COUT, L, K = 2, 4, 8, 16, 3
    STRIDE, PADDING, DILATION = 1, 1, 1

    key = jax.random.PRNGKey(0)
    kx, kw, kb, kg, kbt = jax.random.split(key, 5)

    x = jax.random.normal(kx, (N, CIN, L), dtype=jnp.float32)
    conv_w = jax.random.normal(kw, (2 * COUT, CIN, K), dtype=jnp.float32) * 0.1
    conv_b = jax.random.normal(kb, (2 * COUT,), dtype=jnp.float32) * 0.1
    bn_gamma = 1.0 + 0.1 * jax.random.normal(kg, (2 * COUT,), dtype=jnp.float32)
    bn_beta = 0.1 * jax.random.normal(kbt, (2 * COUT,), dtype=jnp.float32)

    out = gated_conv_bn_1d(x, conv_w, conv_b, bn_gamma, bn_beta,
                           stride=STRIDE, padding=PADDING, dilation=DILATION)
    out = jax.block_until_ready(out)

    ref = _reference(x, conv_w, conv_b, bn_gamma, bn_beta,
                     stride=STRIDE, padding=PADDING, dilation=DILATION)
    assert out.shape == ref.shape, (out.shape, ref.shape)
    assert jnp.allclose(out, ref, rtol=1e-4, atol=1e-4), float(jnp.max(jnp.abs(out - ref)))

    print("KERNEL_OK")
</pallas_src>

<mosaic_0001>
module attributes {stable_mosaic.version = 11 : i64} {
  func.func @_conv_stats_kernel(%arg0: i32, %arg1: memref<32x128xf32, #tpu.memory_space<vmem>>, %arg2: memref<128x256xf32, #tpu.memory_space<vmem>>, %arg3: memref<32x256xf32, #tpu.memory_space<vmem>>, %arg4: memref<1x256xf32, #tpu.memory_space<vmem>>, %arg5: memref<1x256xf32, #tpu.memory_space<vmem>>) attributes {dimension_semantics = [#tpu.dimension_semantics<arbitrary>], iteration_bounds = array<i64: 1>, scalar_prefetch = 0 : i64, scratch_operands = 0 : i64, tpu.core_type = #tpu.core_type<tc>, window_params = [{transform_indices = @transform_0, window_bounds = array<i64: 32, 128>}, {pipeline_mode = #tpu.pipeline_mode<synchronous>, transform_indices = @transform_1, window_bounds = array<i64: 128, 256>}, {transform_indices = @transform_2, window_bounds = array<i64: 32, 256>}, {pipeline_mode = #tpu.pipeline_mode<synchronous>, transform_indices = @transform_3, window_bounds = array<i64: 1, 256>}, {pipeline_mode = #tpu.pipeline_mode<synchronous>, transform_indices = @transform_4, window_bounds = array<i64: 1, 256>}]} {
    %c0_i32 = arith.constant 0 : i32
    %0 = arith.cmpi eq, %arg0, %c0_i32 : i32
    %1 = arith.extui %0 : i1 to i32
    %c0_i32_0 = arith.constant 0 : i32
    %2 = arith.cmpi ne, %1, %c0_i32_0 : i32
    scf.if %2 {
      %cst_16 = arith.constant 0.000000e+00 : f32
      %18 = vector.broadcast %cst_16 : f32 to vector<1x256xf32>
      %c0_17 = arith.constant 0 : index
      %c0_18 = arith.constant 0 : index
      %19 = vector.load %arg4[%c0_17, %c0_18] : memref<1x256xf32, #tpu.memory_space<vmem>>, vector<1x256xf32>
      tpu.vector_store %arg4[%c0_17, %c0_18], %18 {strides = array<i32>} : memref<1x256xf32, #tpu.memory_space<vmem>>, vector<1x256xf32>,
      %cst_19 = arith.constant 0.000000e+00 : f32
      %20 = vector.broadcast %cst_19 : f32 to vector<1x256xf32>
      %c0_20 = arith.constant 0 : index
      %c0_21 = arith.constant 0 : index
      %21 = vector.load %arg5[%c0_20, %c0_21] : memref<1x256xf32, #tpu.memory_space<vmem>>, vector<1x256xf32>
      tpu.vector_store %arg5[%c0_20, %c0_21], %20 {strides = array<i32>} : memref<1x256xf32, #tpu.memory_space<vmem>>, vector<1x256xf32>,
    } else {
    }
    %c0 = arith.constant 0 : index
    %c0_1 = arith.constant 0 : index
    %3 = vector.load %arg1[%c0, %c0_1] : memref<32x128xf32, #tpu.memory_space<vmem>>, vector<32x128xf32>
    %c0_2 = arith.constant 0 : index
    %c0_3 = arith.constant 0 : index
    %4 = vector.load %arg2[%c0_2, %c0_3] : memref<128x256xf32, #tpu.memory_space<vmem>>, vector<128x256xf32>
    %cst = arith.constant dense<0.000000e+00> : vector<32x256xf32>
    %5 = tpu.matmul %3, %4, %cst {dimension_numbers = #tpu.dot_dimension_numbers<[1], [0], [0], [1], [0, 0, 1, 1], [], []>} : vector<32x128xf32>, vector<128x256xf32>, vector<32x256xf32> -> vector<32x256xf32>
    %c0_4 = arith.constant 0 : index
    %c0_5 = arith.constant 0 : index
    %6 = vector.load %arg3[%c0_4, %c0_5] : memref<32x256xf32, #tpu.memory_space<vmem>>, vector<32x256xf32>
    tpu.vector_store %arg3[%c0_4, %c0_5], %5 {strides = array<i32>} : memref<32x256xf32, #tpu.memory_space<vmem>>, vector<32x256xf32>,
    %c0_6 = arith.constant 0 : index
    %c0_7 = arith.constant 0 : index
    %7 = vector.load %arg4[%c0_6, %c0_7] : memref<1x256xf32, #tpu.memory_space<vmem>>, vector<1x256xf32>
    %cst_8 = arith.constant dense<0.000000e+00> : vector<256xf32>
    %8 = vector.multi_reduction <add>, %5, %cst_8 [0] : vector<32x256xf32> to vector<256xf32>
    %9 = vector.shape_cast %8 : vector<256xf32> to vector<1x256xf32>
    %10 = arith.addf %7, %9 : vector<1x256xf32>
    %c0_9 = arith.constant 0 : index
    %c0_10 = arith.constant 0 : index
    %11 = vector.load %arg4[%c0_9, %c0_10] : memref<1x256xf32, #tpu.memory_space<vmem>>, vector<1x256xf32>
    tpu.vector_store %arg4[%c0_9, %c0_10], %10 {strides = array<i32>} : memref<1x256xf32, #tpu.memory_space<vmem>>, vector<1x256xf32>,
    %c0_11 = arith.constant 0 : index
    %c0_12 = arith.constant 0 : index
    %12 = vector.load %arg5[%c0_11, %c0_12] : memref<1x256xf32, #tpu.memory_space<vmem>>, vector<1x256xf32>
    %13 = arith.mulf %5, %5 : vector<32x256xf32>
    %cst_13 = arith.constant dense<0.000000e+00> : vector<256xf32>
    %14 = vector.multi_reduction <add>, %13, %cst_13 [0] : vector<32x256xf32> to vector<256xf32>
    %15 = vector.shape_cast %14 : vector<256xf32> to vector<1x256xf32>
    %16 = arith.addf %12, %15 : vector<1x256xf32>
    %c0_14 = arith.constant 0 : index
    %c0_15 = arith.constant 0 : index
    %17 = vector.load %arg5[%c0_14, %c0_15] : memref<1x256xf32, #tpu.memory_space<vmem>>, vector<1x256xf32>
    tpu.vector_store %arg5[%c0_14, %c0_15], %16 {strides = array<i32>} : memref<1x256xf32, #tpu.memory_space<vmem>>, vector<1x256xf32>,
    return
  }
  func.func @transform_0(%arg0: i32) -> (i32, i32) {
    %c0_i32 = arith.constant 0 : i32
    %c0_i32_0 = arith.constant 0 : i32
    return %arg0, %c0_i32 : i32, i32
  }
  func.func @transform_1(%arg0: i32) -> (i32, i32) {
    %c0_i32 = arith.constant 0 : i32
    %c0_i32_0 = arith.constant 0 : i32
    %c0_i32_1 = arith.constant 0 : i32
    return %c0_i32, %c0_i32_0 : i32, i32
  }
  func.func @transform_2(%arg0: i32) -> (i32, i32) {
    %c0_i32 = arith.constant 0 : i32
    %c0_i32_0 = arith.constant 0 : i32
    return %arg0, %c0_i32 : i32, i32
  }
  func.func @transform_3(%arg0: i32) -> (i32, i32) {
    %c0_i32 = arith.constant 0 : i32
    %c0_i32_0 = arith.constant 0 : i32
    %c0_i32_1 = arith.constant 0 : i32
    return %c0_i32, %c0_i32_0 : i32, i32
  }
  func.func @transform_4(%arg0: i32) -> (i32, i32) {
    %c0_i32 = arith.constant 0 : i32
    %c0_i32_0 = arith.constant 0 : i32
    %c0_i32_1 = arith.constant 0 : i32
    return %c0_i32, %c0_i32_0 : i32, i32
  }
}

</mosaic_0001>

<llo_original>
// kernel: tpu_custom_call.1
$region0: #{tpu_custom_call.1}
  #allocation0 [shape = 'u32[]', space=smem, size = 0x4, offset = 0x4, fixed_abs, tag = 'smem constant byte address 0x4 - core index']
  #allocation1 [shape = 'u32[144,128]{1,0:T(1,128)}', space=vmem, size = 0x12000, scoped, tag = 'internal scratch']
  %s0 = inlined_call_operand.hbm [shape: f32[32,128], index: 0, kind: input, shape index: {}]
  %s1 = inlined_call_operand.hbm [shape: f32[128,256], index: 1, kind: input, shape index: {}]
  %s2 = inlined_call_operand.hbm [shape: f32[32,256], index: 2, kind: output, shape index: {0}]
  %s3 = inlined_call_operand.hbm [shape: f32[1,256], index: 3, kind: output, shape index: {1}]
  %s4 = inlined_call_operand.hbm [shape: f32[1,256], index: 4, kind: output, shape index: {2}]
  %5 = xla_tuple %s2, %s3, %s4
  %s6 = sld [smem:[#allocation0]]
  $region46: #{tpu_custom_call.1} parent=0
    _
  %s8 = ssub.s32 1, %s6
  %s9 = scalar_select 0, %s8, %s6
  $region1: #{tpu_custom_call.1} parent=0
    #allocation2 [shape = 'u8[16384]{0}', space=vmem, size = 0x4000, scoped, tag = 'input window, operand 0, single buffered']
    #allocation3 [shape = 's32[1]{0}', space=sflag, size = 0x4, scoped, tag = 'scoped memory for tpu_custom_call.1']
    #allocation4 [shape = 's32[1]{0}', space=sflag, size = 0x4, scoped, tag = 'scoped memory for tpu_custom_call.1']
    #allocation5 [shape = 'u8[131072]{0}', space=vmem, size = 0x20000, scoped, tag = 'input window, operand 1, single buffered']
    #allocation6 [shape = 's32[1]{0}', space=sflag, size = 0x4, scoped, tag = 'scoped memory for tpu_custom_call.1']
    #allocation7 [shape = 'u8[32768]{0}', space=vmem, size = 0x8000, scoped, tag = 'output window, operand 0, single buffered']
    #allocation8 [shape = 'u8[1024]{0}', space=vmem, size = 0x400, scoped, tag = 'output window, operand 1, single buffered']
    #allocation9 [shape = 's32[1]{0}', space=sflag, size = 0x4, scoped, tag = 'scoped memory for tpu_custom_call.1']
    #allocation10 [shape = 'u8[1024]{0}', space=vmem, size = 0x400, scoped, tag = 'output window, operand 2, single buffered']
    %10 = vsyncpa [#allocation3], 0
    %11 = vsyncpa [#allocation6], 0
    %12 = vsyncpa [#allocation4], 0
    %13 = vsyncpa [#allocation9], 0
    // Predicated region
    $region2: #{tpu_custom_call.1} parent=1 // pred_check
      _
    $region3: #{tpu_custom_call.1} parent=1 // pred_check_branch
      %15 = sbr.rel (0) target = $region5
    $region4: #{tpu_custom_call.1} parent=1 // pred_region
      %s17 = ssub.s32 512, 512
      %18 = vsyncadd [#allocation3], %s17
      %s19 = sshll.u32 [#allocation2], 4
      %s20 = int_to_ptr.vmem [resolvable:$true] %s19
      %25 = dma.hbm_to_vmem [thread:$0]  %s0, 512, %s20, [#allocation3], 128, 128, 8
    $region5: #{tpu_custom_call.1} parent=1 // pred_fallthru
      _
    // Predicated region
    $region6: #{tpu_custom_call.1} parent=1 // pred_check
      _
    $region7: #{tpu_custom_call.1} parent=1 // pred_check_branch
      %27 = sbr.rel (0) target = $region9
    $region8: #{tpu_custom_call.1} parent=1 // pred_region
      %s29 = ssub.s32 4096, 4096
      %30 = vsyncadd [#allocation6], %s29
      %s31 = sshll.u32 [#allocation5], 4
      %s32 = int_to_ptr.vmem [resolvable:$true] %s31
      %37 = dma.hbm_to_vmem [thread:$0]  %s1, 4096, %s32, [#allocation6], 256, 256, 16
    $region9: #{tpu_custom_call.1} parent=1 // pred_fallthru
      _
    // Predicated region
    $region10: #{tpu_custom_call.1} parent=1 // pred_check
      _
    $region11: #{tpu_custom_call.1} parent=1 // pred_check_branch
      %39 = sbr.rel (0) target = $region13
    $region12: #{tpu_custom_call.1} parent=1 // pred_region
      %40 = dma.done [#allocation3], 512
    $region13: #{tpu_custom_call.1} parent=1 // pred_fallthru
      _
    // Predicated region
    $region14: #{tpu_custom_call.1} parent=1 // pred_check
      _
    $region15: #{tpu_custom_call.1} parent=1 // pred_check_branch
      %42 = sbr.rel (0) target = $region17
    $region16: #{tpu_custom_call.1} parent=1 // pred_region
      %43 = dma.done [#allocation6], 4096
    $region17: #{tpu_custom_call.1} parent=1 // pred_fallthru
      _
    %p44 = scmp.eq.s32.totalorder 0, 0
    // Predicated region
    $region18: #{tpu_custom_call.1} parent=1 // pred_check
      %p45 = pneg %p44
    $region19: #{tpu_custom_call.1} parent=1 // pred_check_branch
      %47 = sbr.rel (%p45) target = $region21
    $region20: #{tpu_custom_call.1} parent=1 // pred_region
      %v48 = vlaneseq
      %vm49 = vcmp.ge.s32.totalorder %v48, 0
      %vm50 = vcmp.lt.s32.totalorder %v48, 256
      %vm51 = vmand %vm49, %vm50
      %52 = vst.msk [vmem:[#allocation8] sm:$0x3] %vm51, 0.0
      %53 = vst.msk [vmem:[#allocation10] sm:$0x3] %vm51, 0.0
    $region21: #{tpu_custom_call.1} parent=1 // pred_fallthru
      _
    %v54 = vld [vmem:[#allocation2] sm:$0xff]
    %v55 = vld [vmem:[#allocation2 + $0x8] sm:$0xff]
    %v56 = vld [vmem:[#allocation2 + $0x10] sm:$0xff]
    %v57 = vld [vmem:[#allocation2 + $0x18] sm:$0xff]
    %v58 = vld [vmem:[#allocation5] sm:$0xff]
    %v59 = vld [vmem:[#allocation5 + $0x8] sm:$0xff]
    %v60 = vld [vmem:[#allocation5 + $0x10] sm:$0xff]
    %v61 = vld [vmem:[#allocation5 + $0x18] sm:$0xff]
    %v62 = vld [vmem:[#allocation5 + $0x20] sm:$0xff]
    %v63 = vld [vmem:[#allocation5 + $0x28] sm:$0xff]
    %v64 = vld [vmem:[#allocation5 + $0x30] sm:$0xff]
    %v65 = vld [vmem:[#allocation5 + $0x38] sm:$0xff]
    %v66 = vld [vmem:[#allocation5 + $0x40] sm:$0xff]
    %v67 = vld [vmem:[#allocation5 + $0x48] sm:$0xff]
    %v68 = vld [vmem:[#allocation5 + $0x50] sm:$0xff]
    %v69 = vld [vmem:[#allocation5 + $0x58] sm:$0xff]
    %v70 = vld [vmem:[#allocation5 + $0x60] sm:$0xff]
    %v71 = vld [vmem:[#allocation5 + $0x68] sm:$0xff]
    %v72 = vld [vmem:[#allocation5 + $0x70] sm:$0xff]
    %v73 = vld [vmem:[#allocation5 + $0x78] sm:$0xff]
    %v74 = vld [vmem:[#allocation5 + $0x80] sm:$0xff]
    %v75 = vld [vmem:[#allocation5 + $0x88] sm:$0xff]
    %v76 = vld [vmem:[#allocation5 + $0x90] sm:$0xff]
    %v77 = vld [vmem:[#allocation5 + $0x98] sm:$0xff]
    %v78 = vld [vmem:[#allocation5 + $0xa0] sm:$0xff]
    %v79 = vld [vmem:[#allocation5 + $0xa8] sm:$0xff]
    %v80 = vld [vmem:[#allocation5 + $0xb0] sm:$0xff]
    %v81 = vld [vmem:[#allocation5 + $0xb8] sm:$0xff]
    %v82 = vld [vmem:[#allocation5 + $0xc0] sm:$0xff]
    %v83 = vld [vmem:[#allocation5 + $0xc8] sm:$0xff]
    %v84 = vld [vmem:[#allocation5 + $0xd0] sm:$0xff]
    %v85 = vld [vmem:[#allocation5 + $0xd8] sm:$0xff]
    %v86 = vld [vmem:[#allocation5 + $0xe0] sm:$0xff]
    %v87 = vld [vmem:[#allocation5 + $0xe8] sm:$0xff]
    %v88 = vld [vmem:[#allocation5 + $0xf0] sm:$0xff]
    %v89 = vld [vmem:[#allocation5 + $0xf8] sm:$0xff]
    %90 = vmatprep.subr.mxu0 %v59
    %91 = vmatpush1.msra.mxu0 %v58
    %92 = vmatprep.subr.mxu0 %v61
    %93 = vmatpush1.msra.mxu0 %v60
    %94 = vmatprep.subr.mxu0 %v63
    %95 = vmatpush1.msra.mxu0 %v62
    %96 = vmatprep.subr.mxu0 %v65
    %97 = vmatpush1.msra.mxu0 %v64
    %98 = vmatprep.subr.mxu0 %v67
    %99 = vmatpush1.msra.mxu0 %v66
    %100 = vmatprep.subr.mxu0 %v69
    %101 = vmatpush1.msra.mxu0 %v68
    %102 = vmatprep.subr.mxu0 %v71
    %103 = vmatpush1.msra.mxu0 %v70
    %104 = vmatprep.subr.mxu0 %v73
    %105 = vmatpush1.msra.mxu0 %v72
    %106 = vmatprep.subr.mxu0 %v75
    %107 = vmatpush1.msra.mxu0 %v74
    %108 = vmatprep.subr.mxu0 %v77
    %109 = vmatpush1.msra.mxu0 %v76
    %110 = vmatprep.subr.mxu0 %v79
    %111 = vmatpush1.msra.mxu0 %v78
    %112 = vmatprep.subr.mxu0 %v81
    %113 = vmatpush1.msra.mxu0 %v80
    %114 = vmatprep.subr.mxu0 %v83
    %115 = vmatpush1.msra.mxu0 %v82
    %116 = vmatprep.subr.mxu0 %v85
    %117 = vmatpush1.msra.mxu0 %v84
    %118 = vmatprep.subr.mxu0 %v87
    %119 = vmatpush1.msra.mxu0 %v86
    %120 = vmatprep.subr.mxu0 %v89
    %121 = vmatpush1.msra.mxu0 %v88
    %122 = vmatprep.subr.mxu0 0.0
    %123 = vmatpush1.msra.mxu0 0.0
    %124 = vmatprep.subr.mxu0 0.0
    %125 = vmatpush1.msra.mxu0 0.0
    %126 = vmatprep.subr.mxu0 0.0
    %127 = vmatpush1.msra.mxu0 0.0
    %128 = vmatprep.subr.mxu0 0.0
    %129 = vmatpush1.msra.mxu0 0.0
    %130 = vmatprep.subr.mxu0 0.0
    %131 = vmatpush1.msra.mxu0 0.0
    %132 = vmatprep.subr.mxu0 0.0
    %133 = vmatpush1.msra.mxu0 0.0
    %134 = vmatprep.subr.mxu0 0.0
    %135 = vmatpush1.msra.mxu0 0.0
    %136 = vmatprep.subr.mxu0 0.0
    %137 = vmatpush1.msra.mxu0 0.0
    %138 = vmatprep.subr.mxu0 0.0
    %139 = vmatpush1.msra.mxu0 0.0
    %140 = vmatprep.subr.mxu0 0.0
    %141 = vmatpush1.msra.mxu0 0.0
    %142 = vmatprep.subr.mxu0 0.0
    %143 = vmatpush1.msra.mxu0 0.0
    %144 = vmatprep.subr.mxu0 0.0
    %145 = vmatpush1.msra.mxu0 0.0
    %146 = vmatprep.subr.mxu0 0.0
    %147 = vmatpush1.msra.mxu0 0.0
    %148 = vmatprep.subr.mxu0 0.0
    %149 = vmatpush1.msra.mxu0 0.0
    %150 = vmatprep.subr.mxu0 0.0
    %151 = vmatpush1.msra.mxu0 0.0
    %152 = vmatprep.subr.mxu0 0.0
    %153 = vmatpush1.msra.mxu0 0.0
    %154 = vmatprep.mubr.f32.mxu0 0.0
    %155 = vmatmul.mubr.f32.gmra.mrb[0].mxu0 %v54
    %v156 = vpop.f32.mrb[0].mxu0
    %v157 = vadd.f32 0.0, %v156
    %v158 = vpop.f32.mrb[0].mxu0
    %v159 = vadd.f32 0.0, %v158
    %160 = vmatprep.mubr.f32.mxu0 0.0
    %161 = vmatmul.mubr.f32.gmra.mrb[0].mxu0 %v55
    %v162 = vpop.f32.mrb[0].mxu0
    %v163 = vadd.f32 0.0, %v162
    %v164 = vpop.f32.mrb[0].mxu0
    %v165 = vadd.f32 0.0, %v164
    %166 = vmatprep.mubr.f32.mxu0 0.0
    %167 = vmatmul.mubr.f32.gmra.mrb[0].mxu0 %v56
    %v168 = vpop.f32.mrb[0].mxu0
    %v169 = vadd.f32 0.0, %v168
    %v170 = vpop.f32.mrb[0].mxu0
    %v171 = vadd.f32 0.0, %v170
    %172 = vmatprep.mubr.f32.mxu0 0.0
    %173 = vmatmul.mubr.f32.gmra.mrb[0].mxu0 %v57
    %v174 = vpop.f32.mrb[0].mxu0
    %v175 = vadd.f32 0.0, %v174
    %v176 = vpop.f32.mrb[0].mxu0
    %v177 = vadd.f32 0.0, %v176
    %178 = vdwg.mxu0
    %179 = vst [vmem:[#allocation7] sm:$0xff] %v157
    %180 = vst [vmem:[#allocation7 + $0x8] sm:$0xff] %v159
    %181 = vst [vmem:[#allocation7 + $0x10] sm:$0xff] %v163
    %182 = vst [vmem:[#allocation7 + $0x18] sm:$0xff] %v165
    %183 = vst [vmem:[#allocation7 + $0x20] sm:$0xff] %v169
    %184 = vst [vmem:[#allocation7 + $0x28] sm:$0xff] %v171
    %185 = vst [vmem:[#allocation7 + $0x30] sm:$0xff] %v175
    %186 = vst [vmem:[#allocation7 + $0x38] sm:$0xff] %v177
    %v187 = vld [vmem:[#allocation8] sm:$0x3]
    %v188 = vadd.f32 %v157, %v163
    %v189 = vadd.f32 %v188, %v169
    %v190 = vadd.f32 %v189, %v175
    %v191 = vrot.slane %v190, 4
    %v192 = vadd.f32 %v190, %v191
    %v193 = vrot.slane %v192, 2
    %v194 = vadd.f32 %v192, %v193
    %v195 = vrot.slane %v194, 1
    %v196 = vadd.f32 %v194, %v195
    %v197 = vadd.f32 %v159, %v165
    %v198 = vadd.f32 %v197, %v171
    %v199 = vadd.f32 %v198, %v177
    %v200 = vrot.slane %v199, 4
    %v201 = vadd.f32 %v199, %v200
    %v202 = vrot.slane %v201, 2
    %v203 = vadd.f32 %v201, %v202
    %v204 = vrot.slane %v203, 1
    %v205 = vadd.f32 %v203, %v204
    %v208 = vcombine.low %v196, %v205
    %v210 = vunpack.c.l.s4 1966171168
    %v211 = vunpack.c.0.s8 %v210
    %v212 = vlaneseq
    %v213 = vshrl.u32 %v212, 7
    %v214 = vsub.s32 %v211, %v213
    %v215 = vrot.slane %v208, %v214
    %v217 = vunpack.c.l.s4 1966171168
    %v218 = vunpack.c.0.s8 %v217
    %v219 = vlaneseq
    %v220 = vshrl.u32 %v219, 7
    %v221 = vsub.s32 %v218, %v220
    %v222 = vrot.slane %v215, %v221
    %v224 = vadd.f32 %v187, %v222
    %v225 = vlaneseq
    %vm226 = vcmp.ge.s32.totalorder %v225, 0
    %vm227 = vcmp.lt.s32.totalorder %v225, 256
    %vm228 = vmand %vm226, %vm227
    %229 = vst.msk [vmem:[#allocation8] sm:$0x3] %vm228, %v224
    %v230 = vld [vmem:[#allocation10] sm:$0x3]
    %v231 = vmul.f32 %v157, %v157
    %v232 = vmul.f32 %v159, %v159
    %v233 = vmul.f32 %v163, %v163
    %v234 = vmul.f32 %v165, %v165
    %v235 = vmul.f32 %v169, %v169
    %v236 = vmul.f32 %v171, %v171
    %v237 = vmul.f32 %v175, %v175
    %v238 = vmul.f32 %v177, %v177
    %v239 = vadd.f32 %v231, %v233
    %v240 = vadd.f32 %v239, %v235
    %v241 = vadd.f32 %v240, %v237
    %v242 = vrot.slane %v241, 4
    %v243 = vadd.f32 %v241, %v242
    %v244 = vrot.slane %v243, 2
    %v245 = vadd.f32 %v243, %v244
    %v246 = vrot.slane %v245, 1
    %v247 = vadd.f32 %v245, %v246
    %v248 = vadd.f32 %v232, %v234
    %v249 = vadd.f32 %v248, %v236
    %v250 = vadd.f32 %v249, %v238
    %v251 = vrot.slane %v250, 4
    %v252 = vadd.f32 %v250, %v251
    %v253 = vrot.slane %v252, 2
    %v254 = vadd.f32 %v252, %v253
    %v255 = vrot.slane %v254, 1
    %v256 = vadd.f32 %v254, %v255
    %v259 = vcombine.low %v247, %v256
    %v261 = vunpack.c.l.s4 1966171168
    %v262 = vunpack.c.0.s8 %v261
    %v263 = vlaneseq
    %v264 = vshrl.u32 %v263, 7
    %v265 = vsub.s32 %v262, %v264
    %v266 = vrot.slane %v259, %v265
    %v268 = vunpack.c.l.s4 1966171168
    %v269 = vunpack.c.0.s8 %v268
    %v270 = vlaneseq
    %v271 = vshrl.u32 %v270, 7
    %v272 = vsub.s32 %v269, %v271
    %v273 = vrot.slane %v266, %v272
    %v275 = vadd.f32 %v230, %v273
    %276 = vst.msk [vmem:[#allocation10] sm:$0x3] %vm228, %v275
    // Predicated region
    $region22: #{tpu_custom_call.1} parent=1 // pred_check
      _
    $region23: #{tpu_custom_call.1} parent=1 // pred_check_branch
      %278 = sbr.rel (0) target = $region25
    $region24: #{tpu_custom_call.1} parent=1 // pred_region
      %s280 = ssub.s32 1024, 1024
      %281 = vsyncadd [#allocation4], %s280
      %s282 = sshll.u32 [#allocation7], 4
      %s283 = int_to_ptr.vmem [resolvable:$true] %s282
      %288 = dma.vmem_to_hbm [thread:$0]  %s283, 1024, %s2, [#allocation4], 256, 256, 16
    $region25: #{tpu_custom_call.1} parent=1 // pred_fallthru
      _
    // Predicated region
    $region26: #{tpu_custom_call.1} parent=1 // pred_check
      _
    $region27: #{tpu_custom_call.1} parent=1 // pred_check_branch
      %290 = sbr.rel (0) target = $region29
    $region28: #{tpu_custom_call.1} parent=1 // pred_region
      %s292 = ssub.s32 32, 32
      %293 = vsyncadd [#allocation9], %s292
      %s295 = sshll.u32 [#allocation8], 4
      %s296 = int_to_ptr.vmem [resolvable:$true] %s295
      %298 = dma.vmem_to_hbm [thread:$0]  %s296, 32, %s3, [#allocation9]
    $region29: #{tpu_custom_call.1} parent=1 // pred_fallthru
      _
    // Predicated region
    $region30: #{tpu_custom_call.1} parent=1 // pred_check
      _
    $region31: #{tpu_custom_call.1} parent=1 // pred_check_branch
      %300 = sbr.rel (0) target = $region33
    $region32: #{tpu_custom_call.1} parent=1 // pred_region
      %s302 = ssub.s32 32, 32
      %303 = vsyncadd [#allocation9], %s302
      %s305 = sshll.u32 [#allocation10], 4
      %s306 = int_to_ptr.vmem [resolvable:$true] %s305
      %308 = dma.vmem_to_hbm [thread:$0]  %s306, 32, %s4, [#allocation9]
    $region33: #{tpu_custom_call.1} parent=1 // pred_fallthru
      _
    // Predicated region
    $region34: #{tpu_custom_call.1} parent=1 // pred_check
      _
    $region35: #{tpu_custom_call.1} parent=1 // pred_check_branch
      %310 = sbr.rel (0) target = $region37
    $region36: #{tpu_custom_call.1} parent=1 // pred_region
      %311 = dma.done [#allocation4], 1024
    $region37: #{tpu_custom_call.1} parent=1 // pred_fallthru
      _
    // Predicated region
    $region38: #{tpu_custom_call.1} parent=1 // pred_check
      _
    $region39: #{tpu_custom_call.1} parent=1 // pred_check_branch
      %313 = sbr.rel (0) target = $region41
    $region40: #{tpu_custom_call.1} parent=1 // pred_region
      %314 = dma.done [#allocation9], 32
    $region41: #{tpu_custom_call.1} parent=1 // pred_fallthru
      _
    // Predicated region
    $region42: #{tpu_custom_call.1} parent=1 // pred_check
      _
    $region43: #{tpu_custom_call.1} parent=1 // pred_check_branch
      %316 = sbr.rel (0) target = $region45
    $region44: #{tpu_custom_call.1} parent=1 // pred_region
      %317 = dma.done [#allocation9], 32
    $region45: #{tpu_custom_call.1} parent=1 // pred_fallthru
      _
    %318 = vsyncpa [#allocation3], 1
    %319 = vsyncpa [#allocation6], 1
    %320 = vsyncpa [#allocation4], 1
    %321 = vsyncpa [#allocation9], 1

</llo_original>
